<compile_context>
chip_gen: v7x
topology: tpu7x:2x2x1
jax: 0.10.0
libtpu: 0.0.40
codegen_flags: <defaults>
</compile_context>

<pallas_src>
import functools

import jax
import jax.numpy as jnp
from jax import lax
from jax.experimental import pallas as pl
from jax.experimental.pallas import tpu as pltpu


def _conv1d_kernel(x_ref, w_ref, b_ref, o_ref, *, K, stride, dilation, TL,
                   activation, compute_dtype):
    """Compute one (C_out, TL) output tile for one batch element.

    x_ref: (L_pad, C_in)      VMEM, full padded length (channels-last); reused
                              across every length tile of this batch element.
    w_ref: (C_out, K * C_in)  VMEM, flattened weight: w[co, k*C_in + ci].
    b_ref: (C_out, 1)         VMEM, bias (f32).
    o_ref: (C_out, TL)        VMEM, output tile in NCL layout (length on lanes).
    """
    t = pl.program_id(1)
    base = t * (TL * stride)
    if (TL * stride) % 8 == 0:
        base = pl.multiple_of(base, 8)

    # Gather the K shifted views and fuse them into one im2col tile so the MXU
    # sees a single matmul with contraction depth K*C_in (instead of K tiny
    # C_in-deep matmuls).  K is a small static constant -> unrolled in Python.
    taps = []
    for k in range(K):
        start = base + k * dilation
        if stride == 1:
            xk = x_ref[pl.ds(start, TL), :]                       # (TL, C_in)
        else:
            # Strided load along the sublane axis straight from the ref.
            xk = x_ref[pl.ds(start, TL, stride=stride), :]        # (TL, C_in)
        taps.append(xk)
    xcol = taps[0] if K == 1 else jnp.concatenate(taps, axis=-1)  # (TL, K*C_in)

    w = w_ref[...]                                                # (C_out, K*C_in)
    if compute_dtype is not None:
        xcol = xcol.astype(compute_dtype)
        w = w.astype(compute_dtype)

    # (C_out, K*C_in) x (TL, K*C_in) contracted on the last dims -> (C_out, TL),
    # f32 accumulation on the MXU.
    acc = lax.dot_general(
        w, xcol,
        dimension_numbers=(((1,), (1,)), ((), ())),
        preferred_element_type=jnp.float32)
    acc = acc + b_ref[...]                        # bias broadcast along lanes
    if activation is not None:
        acc = activation(acc)
    o_ref[...] = acc.astype(o_ref.dtype)


def conv1d_pallas(x, weight, bias, *, stride=1, dilation=1, padding="same",
                  activation=None, compute_dtype=None, max_tile=512):
    """Conv1D.forward equivalent.

    x:      (B, C_in, L)       -- NCL, like torch.nn.Conv1d input
    weight: (C_out, C_in, K)
    bias:   (C_out,)
    returns (B, C_out, L_out)  -- NCL, no output transpose needed
    """
    B, C_in, L = x.shape
    C_out, C_in_w, K = weight.shape
    assert C_in_w == C_in, (C_in_w, C_in)

    if padding in (None, "same"):
        pad = (K - 1) // 2  # matches the reference module's int((K-1)/2)
    elif padding == "none":
        pad = 0
    else:
        raise NotImplementedError(f"Padding {padding} is not implemented.")

    L_out = (L + 2 * pad - dilation * (K - 1) - 1) // stride + 1
    assert L_out > 0, "empty output"

    # Length tiling: TL is the lane dimension of each output tile (either the
    # full output length, or a 128-multiple `max_tile` chunk of it).
    TL = L_out if L_out <= max_tile else max_tile          # max_tile % 128 == 0
    T = pl.cdiv(L_out, TL)
    L_out_padded = T * TL

    # Pad the input so every tile's receptive field is in-bounds.
    L_need = (L_out_padded - 1) * stride + (K - 1) * dilation + 1
    L_pad_total = max(L + 2 * pad, L_need)
    pad_right = L_pad_total - L - pad
    assert (L_out_padded - 1) * stride + (K - 1) * dilation + 1 <= L_pad_total

    # Wrapper-side glue (single HBM pass over x): channels-last + length pad.
    # TODO(synk): fuse the NCL->NLC transpose / padding into the kernel and use
    # halo-tiled input blocks so very long sequences do not require the whole
    # padded batch row to be resident in VMEM.
    x_cl = jnp.transpose(x, (0, 2, 1))                           # (B, L, C_in)
    x_cl = jnp.pad(x_cl, ((0, 0), (pad, pad_right), (0, 0)))     # (B, L_pad, C_in)

    # w_flat[co, k*C_in + ci] = weight[co, ci, k]  (matches xcol tap ordering).
    w_flat = jnp.transpose(weight, (0, 2, 1)).reshape(C_out, K * C_in)
    b2 = bias.astype(jnp.float32).reshape(C_out, 1)
    if compute_dtype is not None:
        w_flat = w_flat.astype(compute_dtype)

    kernel = functools.partial(
        _conv1d_kernel, K=K, stride=stride, dilation=dilation, TL=TL,
        activation=activation, compute_dtype=compute_dtype)

    # Explicit VMEM budget: 2x input block + 2x output block + weight + bias
    # (double-buffered), plus slack for the im2col tile / accumulator.
    itemsize = jnp.dtype(x.dtype).itemsize
    vmem_need = (2 * L_pad_total * C_in * itemsize
                 + 2 * C_out * TL * itemsize
                 + 2 * C_out * K * C_in * 4
                 + 2 * C_out * 4
                 + (2 << 20))
    vmem_limit = int(min(max(vmem_need, 16 * 1024 * 1024), 64 * 1024 * 1024))

    bytes_accessed = (B * L_pad_total * C_in * itemsize
                      + C_out * K * C_in * jnp.dtype(w_flat.dtype).itemsize
                      + C_out * 4
                      + B * C_out * L_out_padded * itemsize)
    cost = pl.CostEstimate(
        flops=2 * B * C_out * K * C_in * L_out_padded,
        transcendentals=0,
        bytes_accessed=int(bytes_accessed))

    out_padded = pl.pallas_call(
        kernel,
        out_shape=jax.ShapeDtypeStruct((B, C_out, L_out_padded), x.dtype),
        grid_spec=pltpu.PrefetchScalarGridSpec(
            num_scalar_prefetch=0,
            grid=(B, T),
            in_specs=[
                # Full per-batch padded input row; the block index ignores the
                # length-tile coordinate so it is fetched once per batch and
                # reused across all length tiles.
                pl.BlockSpec((None, L_pad_total, C_in), lambda b, t: (b, 0, 0)),
                pl.BlockSpec((C_out, K * C_in), lambda b, t: (0, 0)),
                pl.BlockSpec((C_out, 1), lambda b, t: (0, 0)),
            ],
            out_specs=pl.BlockSpec((None, C_out, TL), lambda b, t: (b, 0, t)),
        ),
        compiler_params=pltpu.CompilerParams(
            dimension_semantics=("parallel", "parallel"),
            vmem_limit_bytes=vmem_limit),
        cost_estimate=cost,
    )(x_cl, w_flat, b2)

    if L_out_padded != L_out:
        out_padded = out_padded[:, :, :L_out]
    return out_padded


if __name__ == "__main__":
    key = jax.random.PRNGKey(0)
    k_x, k_w, k_b = jax.random.split(key, 3)

    # Small shapes consistent with Conv1D: batch=2, in_channels=4, length=16,
    # filters=8, kernel_size=3, padding="same", stride=1, dilation=1.
    B, C_in, L = 2, 4, 16
    filters, kernel_size = 8, 3

    x = jax.random.normal(k_x, (B, C_in, L), dtype=jnp.float32)

    # Deterministic orthogonal init (mirrors torch.nn.init.orthogonal_ on the
    # (filters, C_in*K) weight matrix), plus Conv1d-style uniform bias.
    w_flat = jax.nn.initializers.orthogonal()(k_w, (filters, C_in * kernel_size),
                                              jnp.float32)
    weight = w_flat.reshape(filters, C_in, kernel_size)
    fan_in = C_in * kernel_size
    bound = 1.0 / (fan_in ** 0.5)
    bias = jax.random.uniform(k_b, (filters,), jnp.float32, -bound, bound)

    # --- "same" padding, no activation ---
    out = conv1d_pallas(x, weight, bias, stride=1, dilation=1, padding="same",
                        activation=None)
    out = jax.block_until_ready(out)
    ref = lax.conv_general_dilated(
        x, weight, window_strides=(1,), padding=[(1, 1)],
        dimension_numbers=("NCH", "OIH", "NCH")) + bias[None, :, None]
    assert out.shape == (B, filters, L), out.shape
    assert jnp.allclose(out, ref, atol=1e-5, rtol=1e-5), "mismatch vs lax conv"

    # --- "same" padding, activation fused into the kernel epilogue ---
    out_relu = conv1d_pallas(x, weight, bias, stride=1, dilation=1,
                             padding="same", activation=jax.nn.relu)
    out_relu = jax.block_until_ready(out_relu)
    assert jnp.allclose(out_relu, jnp.maximum(ref, 0.0), atol=1e-5, rtol=1e-5), \
        "mismatch vs lax conv + relu"

    # --- "none" padding ---
    out_np = conv1d_pallas(x, weight, bias, stride=1, dilation=1,
                           padding="none", activation=None)
    out_np = jax.block_until_ready(out_np)
    ref_np = lax.conv_general_dilated(
        x, weight, window_strides=(1,), padding=[(0, 0)],
        dimension_numbers=("NCH", "OIH", "NCH")) + bias[None, :, None]
    assert out_np.shape == ref_np.shape, (out_np.shape, ref_np.shape)
    assert jnp.allclose(out_np, ref_np, atol=1e-5, rtol=1e-5), \
        "mismatch vs lax conv (padding=none)"

    # --- dilation = 2, "same" padding (same lane/sublane layout path) ---
    out_dil = conv1d_pallas(x, weight, bias, stride=1, dilation=2,
                            padding="same", activation=None)
    out_dil = jax.block_until_ready(out_dil)
    ref_dil = lax.conv_general_dilated(
        x, weight, window_strides=(1,), padding=[(1, 1)], rhs_dilation=(2,),
        dimension_numbers=("NCH", "OIH", "NCH")) + bias[None, :, None]
    assert out_dil.shape == ref_dil.shape, (out_dil.shape, ref_dil.shape)
    assert jnp.allclose(out_dil, ref_dil, atol=1e-5, rtol=1e-5), \
        "mismatch vs lax conv (dilation=2)"

    print("KERNEL_OK")
</pallas_src>

<mosaic_0001>
module attributes {stable_mosaic.version = 11 : i64} {
  func.func @_conv1d_kernel(%arg0: i32, %arg1: i32, %arg2: memref<1x18x4xf32, #tpu.memory_space<vmem>>, %arg3: memref<8x12xf32, #tpu.memory_space<vmem>>, %arg4: memref<8x1xf32, #tpu.memory_space<vmem>>, %arg5: memref<1x8x16xf32, #tpu.memory_space<vmem>>) attributes {dimension_semantics = [#tpu.dimension_semantics<parallel>, #tpu.dimension_semantics<parallel>], iteration_bounds = array<i64: 2, 1>, scalar_prefetch = 0 : i64, scratch_operands = 0 : i64, tpu.core_type = #tpu.core_type<tc>, window_params = [{transform_indices = @transform_0, window_bounds = array<i64: 1, 18, 4>}, {pipeline_mode = #tpu.pipeline_mode<synchronous>, transform_indices = @transform_1, window_bounds = array<i64: 8, 12>}, {pipeline_mode = #tpu.pipeline_mode<synchronous>, transform_indices = @transform_2, window_bounds = array<i64: 8, 1>}, {transform_indices = @transform_3, window_bounds = array<i64: 1, 8, 16>}]} {
    %c16_i32 = arith.constant 16 : i32
    %0 = arith.muli %arg1, %c16_i32 : i32
    %1 = tpu.assume_multiple %0, 8 : i32
    %c0_i32 = arith.constant 0 : i32
    %2 = arith.addi %1, %c0_i32 : i32
    %c0 = arith.constant 0 : index
    %3 = arith.index_cast %2 : i32 to index
    %c0_0 = arith.constant 0 : index
    %4 = vector.load %arg2[%c0, %3, %c0_0] : memref<1x18x4xf32, #tpu.memory_space<vmem>>, vector<1x16x4xf32>
    %5 = vector.shape_cast %4 : vector<1x16x4xf32> to vector<16x4xf32>
    %c1_i32 = arith.constant 1 : i32
    %6 = arith.addi %1, %c1_i32 : i32
    %c0_1 = arith.constant 0 : index
    %7 = arith.index_cast %6 : i32 to index
    %c0_2 = arith.constant 0 : index
    %8 = vector.load %arg2[%c0_1, %7, %c0_2] : memref<1x18x4xf32, #tpu.memory_space<vmem>>, vector<1x16x4xf32>
    %9 = vector.shape_cast %8 : vector<1x16x4xf32> to vector<16x4xf32>
    %c2_i32 = arith.constant 2 : i32
    %10 = arith.addi %1, %c2_i32 : i32
    %c0_3 = arith.constant 0 : index
    %11 = arith.index_cast %10 : i32 to index
    %c0_4 = arith.constant 0 : index
    %12 = vector.load %arg2[%c0_3, %11, %c0_4] : memref<1x18x4xf32, #tpu.memory_space<vmem>>, vector<1x16x4xf32>
    %13 = vector.shape_cast %12 : vector<1x16x4xf32> to vector<16x4xf32>
    %14 = tpu.concatenate %5, %9, %13 in 1 : vector<16x4xf32>, vector<16x4xf32>, vector<16x4xf32> -> vector<16x12xf32>
    %c0_5 = arith.constant 0 : index
    %c0_6 = arith.constant 0 : index
    %15 = vector.load %arg3[%c0_5, %c0_6] : memref<8x12xf32, #tpu.memory_space<vmem>>, vector<8x12xf32>
    %cst = arith.constant dense<0.000000e+00> : vector<8x16xf32>
    %16 = tpu.matmul %15, %14, %cst {dimension_numbers = #tpu.dot_dimension_numbers<[1], [1], [0], [0], [0, 0, 1, 0], [], []>} : vector<8x12xf32>, vector<16x12xf32>, vector<8x16xf32> -> vector<8x16xf32>
    %c0_7 = arith.constant 0 : index
    %c0_8 = arith.constant 0 : index
    %17 = vector.load %arg4[%c0_7, %c0_8] : memref<8x1xf32, #tpu.memory_space<vmem>>, vector<8x1xf32>
    %18 = vector.broadcast %17 : vector<8x1xf32> to vector<8x16xf32>
    %19 = arith.addf %16, %18 : vector<8x16xf32>
    %c0_9 = arith.constant 0 : index
    %c0_10 = arith.constant 0 : index
    %c0_11 = arith.constant 0 : index
    %20 = vector.load %arg5[%c0_9, %c0_10, %c0_11] : memref<1x8x16xf32, #tpu.memory_space<vmem>>, vector<1x8x16xf32>
    %21 = vector.shape_cast %20 : vector<1x8x16xf32> to vector<8x16xf32>
    %22 = vector.shape_cast %19 : vector<8x16xf32> to vector<1x8x16xf32>
    tpu.vector_store %arg5[%c0_9, %c0_10, %c0_11], %22 {strides = array<i32>} : memref<1x8x16xf32, #tpu.memory_space<vmem>>, vector<1x8x16xf32>,
    return
  }
  func.func @transform_0(%arg0: i32, %arg1: i32) -> (i32, i32, i32) {
    %c0_i32 = arith.constant 0 : i32
    %c0_i32_0 = arith.constant 0 : i32
    %c0_i32_1 = arith.constant 0 : i32
    return %arg0, %c0_i32, %c0_i32_0 : i32, i32, i32
  }
  func.func @transform_1(%arg0: i32, %arg1: i32) -> (i32, i32) {
    %c0_i32 = arith.constant 0 : i32
    %c0_i32_0 = arith.constant 0 : i32
    %c0_i32_1 = arith.constant 0 : i32
    return %c0_i32, %c0_i32_0 : i32, i32
  }
  func.func @transform_2(%arg0: i32, %arg1: i32) -> (i32, i32) {
    %c0_i32 = arith.constant 0 : i32
    %c0_i32_0 = arith.constant 0 : i32
    %c0_i32_1 = arith.constant 0 : i32
    return %c0_i32, %c0_i32_0 : i32, i32
  }
  func.func @transform_3(%arg0: i32, %arg1: i32) -> (i32, i32, i32) {
    %c0_i32 = arith.constant 0 : i32
    %c0_i32_0 = arith.constant 0 : i32
    return %arg0, %c0_i32, %arg1 : i32, i32, i32
  }
}

</mosaic_0001>

<llo_original>
// kernel: tpu_custom_call.1
$region0: #{tpu_custom_call.1}
  #allocation0 [shape = 'u32[]', space=smem, size = 0x4, offset = 0x4, fixed_abs, tag = 'smem constant byte address 0x4 - core index']
  #allocation1 [shape = 'u32[144,128]{1,0:T(1,128)}', space=vmem, size = 0x12000, scoped, tag = 'internal scratch']
  %s0 = inlined_call_operand.vmem [shape: f32[2,18,4], index: 0, kind: input, shape index: {}]
  %s1 = inlined_call_operand.vmem [shape: f32[8,12], index: 1, kind: input, shape index: {}]
  %s2 = inlined_call_operand.vmem [shape: f32[8,1], index: 2, kind: input, shape index: {}]
  %s3 = inlined_call_operand.hbm [shape: f32[2,8,16], index: 3, kind: output, shape index: {}]
  %s4 = sld [smem:[#allocation0]]
  $region45: #{tpu_custom_call.1} parent=0
    _
  %s6 = ssub.s32 1, %s4
  %s7 = scalar_select 0, %s6, %s4
  $region1: #{tpu_custom_call.1} parent=0
    #allocation2 [shape = 'u8[8192]{0}', space=vmem, size = 0x2000, scoped, tag = 'output window, operand 0']
    #allocation3 [shape = 's32[2]{0}', space=sflag, size = 0x8, scoped, tag = 'scoped memory for tpu_custom_call.1']
    %8 = vsyncpa [#allocation3], 0
    %s9 = scalar_lea.sflag [#allocation3], 1
    %10 = vsyncpa %s9, 0
    loop: start=0, step=1, limit=4
    $region2: #{tpu_custom_call.1} parent=1 // loop_pre_header
      _
    $region3: #{tpu_custom_call.1} parent=1 // loop_header
      %s12 = sphi 0, %s16
      %p13 = scmp.ge.s32.totalorder %s12, 4
      %s19 = sphi 0, %s31
      %s20 = sphi 0, %s27
      %s21 = sphi 0, %s19
      %s22 = sphi 0, %s20
      %s23 = sphi 0, %s21
      %s24 = sphi 0, %s22
      %s34 = sphi 0, %s36
      %s37 = sphi 0, %s34
      %s38 = sphi 0, %s37
      %s54 = sphi 0, %s38
      %s58 = sphi 0, %s58
      %s60 = sphi 0, %s58
      %s61 = sphi 0, %s60
      %s75 = sphi 0, %s61
      %s79 = sphi 0, %s79
      %s81 = sphi 0, %s79
      %s82 = sphi 0, %s81
      %s96 = sphi 0, %s82
      %s104 = sphi 0, %s106
      %s107 = sphi 0, %s104
      %s108 = sphi 0, %s107
      %s124 = sphi 0, %s108
    $region4: #{tpu_custom_call.1} parent=1 // loop_header_branch
      %15 = sbr.rel (%p13) target = $region8
    $region5: #{tpu_custom_call.1} parent=1 // loop_body
      %s17 = ssub.s32 %s12, 1
      %s18 = ssub.s32 %s12, 2
      %s25 = sadd.s32 1, %s20
      %p26 = scmp.ge.s32.totalorder %s25, 1
      %s27 = scalar_select %p26, 0, %s25
      %s28 = sadd.s32 1, %s19
      %s29 = scalar_select %p26, %s28, %s19
      %p30 = scmp.ge.s32.totalorder %s29, 2
      %s31 = scalar_select %p30, 0, %s29
      %s32 = ssub.s32 %s19, %s31
      %p33 = scmp.eq.s32.totalorder %s32, 0
      %s35 = sadd.s32 %s34, 1
      %s36 = scalar_select %p33, %s34, %s35
      %p39 = pneg %p33
      %p40 = scmp.eq.s32.totalorder %s12, 1
      %p41 = por %p39, %p40
      %p42 = scmp.ne.s32.totalorder %s34, %s37
      %p43 = scmp.eq.s32.totalorder %s12, 0
      %p44 = por %p42, %p43
      %p45 = scmp.ne.s32.totalorder %s34, %s37
      %p46 = scmp.eq.s32.totalorder %s17, 1
      %p47 = por %p45, %p46
      %p48 = scmp.ne.s32.totalorder %s37, %s38
      %p49 = scmp.eq.s32.totalorder %s17, 0
      %p50 = por %p48, %p49
      %p51 = scmp.ne.s32.totalorder %s37, %s38
      %p52 = scmp.eq.s32.totalorder %s18, 1
      %p53 = por %p51, %p52
      %p55 = scmp.ne.s32.totalorder %s38, %s54
      %p56 = scmp.eq.s32.totalorder %s18, 0
      %p57 = por %p55, %p56
      %s59 = sadd.s32 %s58, 1
      %p62 = scmp.eq.s32.totalorder %s12, 1
      %p63 = scmp.ne.s32.totalorder %s58, %s60
      %p64 = scmp.eq.s32.totalorder %s12, 0
      %p65 = por %p63, %p64
      %p66 = scmp.ne.s32.totalorder %s58, %s60
      %p67 = scmp.eq.s32.totalorder %s17, 1
      %p68 = por %p66, %p67
      %p69 = scmp.ne.s32.totalorder %s60, %s61
      %p70 = scmp.eq.s32.totalorder %s17, 0
      %p71 = por %p69, %p70
      %p72 = scmp.ne.s32.totalorder %s60, %s61
      %p73 = scmp.eq.s32.totalorder %s18, 1
      %p74 = por %p72, %p73
      %p76 = scmp.ne.s32.totalorder %s61, %s75
      %p77 = scmp.eq.s32.totalorder %s18, 0
      %p78 = por %p76, %p77
      %s80 = sadd.s32 %s79, 1
      %p83 = scmp.eq.s32.totalorder %s12, 1
      %p84 = scmp.ne.s32.totalorder %s79, %s81
      %p85 = scmp.eq.s32.totalorder %s12, 0
      %p86 = por %p84, %p85
      %p87 = scmp.ne.s32.totalorder %s79, %s81
      %p88 = scmp.eq.s32.totalorder %s17, 1
      %p89 = por %p87, %p88
      %p90 = scmp.ne.s32.totalorder %s81, %s82
      %p91 = scmp.eq.s32.totalorder %s17, 0
      %p92 = por %p90, %p91
      %p93 = scmp.ne.s32.totalorder %s81, %s82
      %p94 = scmp.eq.s32.totalorder %s18, 1
      %p95 = por %p93, %p94
      %p97 = scmp.ne.s32.totalorder %s82, %s96
      %p98 = scmp.eq.s32.totalorder %s18, 0
      %p99 = por %p97, %p98
      %s100 = ssub.s32 %s19, %s31
      %s101 = ssub.s32 %s20, %s27
      %s102 = sor.u32 %s100, %s101
      %p103 = scmp.eq.s32.totalorder %s102, 0
      %s105 = sadd.s32 %s104, 1
      %s106 = scalar_select %p103, %s104, %s105
      %p109 = pneg %p103
      %p110 = scmp.eq.s32.totalorder %s12, 1
      %p111 = por %p109, %p110
      %p112 = scmp.ne.s32.totalorder %s104, %s107
      %p113 = scmp.eq.s32.totalorder %s12, 0
      %p114 = por %p112, %p113
      %p115 = scmp.ne.s32.totalorder %s104, %s107
      %p116 = scmp.eq.s32.totalorder %s17, 1
      %p117 = por %p115, %p116
      %p118 = scmp.ne.s32.totalorder %s107, %s108
      %p119 = scmp.eq.s32.totalorder %s17, 0
      %p120 = por %p118, %p119
      %p121 = scmp.ne.s32.totalorder %s107, %s108
      %p122 = scmp.eq.s32.totalorder %s18, 1
      %p123 = por %p121, %p122
      %p125 = scmp.ne.s32.totalorder %s108, %s124
      %p126 = scmp.eq.s32.totalorder %s18, 0
      %p127 = por %p125, %p126
      %p128 = scmp.le.s32.totalorder 1, %s12
      %p129 = scmp.lt.s32.totalorder %s12, 3
      %p130 = pnand %p128, %p129
      %p131 = pneg %p130
      // Predicated region
      $region9: #{tpu_custom_call.1} parent=5 // pred_check
        _
      $region10: #{tpu_custom_call.1} parent=5 // pred_check_branch
        %133 = sbr.rel (%p130) target = $region12
      $region11: #{tpu_custom_call.1} parent=5 // pred_region
        %s134 = ssub.s32 %s12, 1
        // Predicated region
        $region13: #{tpu_custom_call.1} parent=11 // pred_check
          %p135 = pneg %p71
        $region14: #{tpu_custom_call.1} parent=11 // pred_check_branch
          %137 = sbr.rel (%p135) target = $region16
        $region15: #{tpu_custom_call.1} parent=11 // pred_region
          _
        $region16: #{tpu_custom_call.1} parent=11 // pred_fallthru
          _
        // Predicated region
        $region17: #{tpu_custom_call.1} parent=11 // pred_check
          %p138 = pneg %p92
        $region18: #{tpu_custom_call.1} parent=11 // pred_check_branch
          %140 = sbr.rel (%p138) target = $region20
        $region19: #{tpu_custom_call.1} parent=11 // pred_region
          _
        $region20: #{tpu_custom_call.1} parent=11 // pred_fallthru
          _
      $region12: #{tpu_custom_call.1} parent=5 // pred_fallthru
        _
      %p141 = scmp.lt.s32.totalorder %s12, 2
      // Predicated region
      $region21: #{tpu_custom_call.1} parent=5 // pred_check
        %p142 = pneg %p141
      $region22: #{tpu_custom_call.1} parent=5 // pred_check_branch
        %144 = sbr.rel (%p142) target = $region24
      $region23: #{tpu_custom_call.1} parent=5 // pred_region
        // Predicated region
        $region25: #{tpu_custom_call.1} parent=23 // pred_check
          %p145 = pneg %p44
        $region26: #{tpu_custom_call.1} parent=23 // pred_check_branch
          %147 = sbr.rel (%p145) target = $region28
        $region27: #{tpu_custom_call.1} parent=23 // pred_region
          %p148 = scmp.lt.s32.totalorder %s19, 1
          %s149 = scalar_select %p148, %s19, 1
          %s150 = smul.addr %s149, 3
          %s151 = smul.addr %s150, 8
          %s152 = scalar_lea.vmem %s0, %s151
        $region28: #{tpu_custom_call.1} parent=23 // pred_fallthru
          _
      $region24: #{tpu_custom_call.1} parent=5 // pred_fallthru
        _
      %p153 = scmp.le.s32.totalorder 1, %s12
      %p154 = scmp.lt.s32.totalorder %s12, 3
      %p155 = pnand %p153, %p154
      %p156 = pneg %p155
      // Predicated region
      $region29: #{tpu_custom_call.1} parent=5 // pred_check
        _
      $region30: #{tpu_custom_call.1} parent=5 // pred_check_branch
        %158 = sbr.rel (%p155) target = $region32
      $region31: #{tpu_custom_call.1} parent=5 // pred_region
        %s159 = ssub.s32 %s12, 1
        %p160 = scmp.lt.s32.totalorder %s21, 1
        %s161 = scalar_select %p160, %s21, 1
        %s162 = smul.addr %s161, 3
        %s163 = smul.addr %s162, 8
        %s164 = scalar_lea.vmem %s0, %s163
        %p165 = pneg %p50
        %p166 = pneg %p47
        %p167 = pneg %p71
        %p168 = pneg %p68
        %p169 = pneg %p92
        %p170 = pneg %p89
        %p171 = pneg %p120
        %p172 = pneg %p117
        %s173 = sand.u32 %s107, 1
        %s174 = scalar_lea.sflag [#allocation3], %s173
        %s175 = sand.u32 %s107, 1
        %s176 = smul.addr %s175, 8
        %s177 = scalar_lea.vmem [#allocation2], %s176
        %p178 = scmp.lt.s32.totalorder %s21, 1
        %s179 = scalar_select %p178, %s21, 1
        %s180 = smul.addr %s179, 3
        %s181 = smul.addr %s180, 8
        %s182 = scalar_lea.vmem %s0, %s181
        %s183 = smul.u32 %s22, 16
        %s184 = scalar_lea.vmem %s182, %s183
        %v185 = vld [vmem:[%s184] sm:$0xff]
        %v186 = vld [vmem:[%s184 + $0x8] sm:$0xff]
        %s187 = sadd.s32 %s183, 1
        %s188 = scalar_lea.vmem %s182, %s187
        %v189 = vld [vmem:[%s188] sm:$0xff]
        %v190 = vld [vmem:[%s188 + $0x8] sm:$0xff]
        %s191 = sadd.s32 %s183, 2
        %s192 = scalar_lea.vmem %s182, %s191
        %v193 = vld [vmem:[%s192] sm:$0xff]
        %v194 = vld [vmem:[%s192 + $0x8] sm:$0xff]
        %197 = vrot.lane.b32.xlu0 %v189, 4
        %v198 = vpop.permute.xlu0 %197
        %199 = vrot.lane.b32.xlu0 %v190, 4
        %v200 = vpop.permute.xlu0 %199
        %205 = vrot.lane.b32.xlu0 %v193, 8
        %v206 = vpop.permute.xlu0 %205
        %207 = vrot.lane.b32.xlu0 %v194, 8
        %v208 = vpop.permute.xlu0 %207
        %vm211 = vcmask 31744
        %v212 = vsel %vm211, %v185, %v198
        %v213 = vsel %vm211, %v186, %v200
        %vm214 = vcmask 64512
        %v215 = vsel %vm214, %v212, %v206
        %v216 = vsel %vm214, %v213, %v208
        %v217 = vld [vmem:[%s1] sm:$0xff]
        %v218 = vld [vmem:[%s2] sm:$0xff]
        %220 = vset.pattern.permute.xlu0 0
        %221 = vperm.xlu0 %220, %v218
        %v222 = vpop.permute.xlu0 %221
        %vm224 = vcmask 97280
        %v226 = vsel %vm224, %v217, 0
        %v229 = vsel %vm224, %v215, 0
        %v232 = vsel %vm224, %v216, 0
        %234 = vmatprep.subr.mxu0 0.0
        %235 = vmatpush1.xpose.msra.mxu0 %v229
        %236 = vmatprep.subr.mxu0 0.0
        %237 = vmatpush1.xpose.msra.mxu0 %v232
        %238 = vmatprep.subr.mxu0 0.0
        %239 = vmatpush1.xpose.msra.mxu0 0.0
        %240 = vmatprep.subr.mxu0 0.0
        %241 = vmatpush1.xpose.msra.mxu0 0.0
        %242 = vmatprep.subr.mxu0 0.0
        %243 = vmatpush1.xpose.msra.mxu0 0.0
        %244 = vmatprep.subr.mxu0 0.0
        %245 = vmatpush1.xpose.msra.mxu0 0.0
        %246 = vmatprep.subr.mxu0 0.0
        %247 = vmatpush1.xpose.msra.mxu0 0.0
        %248 = vmatprep.subr.mxu0 0.0
        %249 = vmatpush1.xpose.msra.mxu0 0.0
        %250 = vmatprep.subr.mxu0 0.0
        %251 = vmatpush1.xpose.msra.mxu0 0.0
        %252 = vmatprep.subr.mxu0 0.0
        %253 = vmatpush1.xpose.msra.mxu0 0.0
        %254 = vmatprep.subr.mxu0 0.0
        %255 = vmatpush1.xpose.msra.mxu0 0.0
        %256 = vmatprep.subr.mxu0 0.0
        %257 = vmatpush1.xpose.msra.mxu0 0.0
        %258 = vmatprep.subr.mxu0 0.0
        %259 = vmatpush1.xpose.msra.mxu0 0.0
        %260 = vmatprep.subr.mxu0 0.0
        %261 = vmatpush1.xpose.msra.mxu0 0.0
        %262 = vmatprep.subr.mxu0 0.0
        %263 = vmatpush1.xpose.msra.mxu0 0.0
        %264 = vmatprep.subr.mxu0 0.0
        %265 = vmatpush1.xpose.msra.mxu0 0.0
        %266 = vmatprep.subr.mxu0 0.0
        %267 = vmatpush1.xpose.msra.mxu0 0.0
        %268 = vmatprep.subr.mxu0 0.0
        %269 = vmatpush1.xpose.msra.mxu0 0.0
        %270 = vmatprep.subr.mxu0 0.0
        %271 = vmatpush1.xpose.msra.mxu0 0.0
        %272 = vmatprep.subr.mxu0 0.0
        %273 = vmatpush1.xpose.msra.mxu0 0.0
        %274 = vmatprep.subr.mxu0 0.0
        %275 = vmatpush1.xpose.msra.mxu0 0.0
        %276 = vmatprep.subr.mxu0 0.0
        %277 = vmatpush1.xpose.msra.mxu0 0.0
        %278 = vmatprep.subr.mxu0 0.0
        %279 = vmatpush1.xpose.msra.mxu0 0.0
        %280 = vmatprep.subr.mxu0 0.0
        %281 = vmatpush1.xpose.msra.mxu0 0.0
        %282 = vmatprep.subr.mxu0 0.0
        %283 = vmatpush1.xpose.msra.mxu0 0.0
        %284 = vmatprep.subr.mxu0 0.0
        %285 = vmatpush1.xpose.msra.mxu0 0.0
        %286 = vmatprep.subr.mxu0 0.0
        %287 = vmatpush1.xpose.msra.mxu0 0.0
        %288 = vmatprep.subr.mxu0 0.0
        %289 = vmatpush1.xpose.msra.mxu0 0.0
        %290 = vmatprep.subr.mxu0 0.0
        %291 = vmatpush1.xpose.msra.mxu0 0.0
        %292 = vmatprep.subr.mxu0 0.0
        %293 = vmatpush1.xpose.msra.mxu0 0.0
        %294 = vmatprep.subr.mxu0 0.0
        %295 = vmatpush1.xpose.msra.mxu0 0.0
        %296 = vmatprep.subr.mxu0 0.0
        %297 = vmatpush1.xpose.msra.mxu0 0.0
        %298 = vmatprep.mubr.f32.mxu0 0.0
        %299 = vmatmul.mubr.f32.gmra.mrb[0].mxu0 %v226
        %v300 = vpop.f32.mrb[0].mxu0
        %v301 = vadd.f32 %v222, %v300
        %v302 = vpop.f32.mrb[0].mxu0
        %303 = vdwg.mxu0
        %vm304 = vcmask 130048
        %305 = vst.msk [vmem:[%s177] sm:$0xff] %vm304, %v301
        %s306 = sand.u32 %s107, 1
        %s307 = scalar_lea.sflag [#allocation3], %s306
        %s308 = sand.u32 %s107, 1
        %s309 = smul.addr %s308, 8
        %s310 = scalar_lea.vmem [#allocation2], %s309
        // Predicated region
        $region33: #{tpu_custom_call.1} parent=31 // pred_check
          %p311 = pneg %p117
        $region34: #{tpu_custom_call.1} parent=31 // pred_check_branch
          %313 = sbr.rel (%p311) target = $region36
        $region35: #{tpu_custom_call.1} parent=31 // pred_region
          %s315 = ssub.s32 128, 128
          %316 = vsyncadd %s307, %s315
          %s317 = sadd.s32 %s22, %s21
          %s318 = smul.addr %s317, 128
          %s319 = scalar_lea.hbm %s3, %s318
          %s321 = sshll.u32 %s310, 4
          %s322 = int_to_ptr.vmem [resolvable:$true] %s321
          %324 = dma.vmem_to_hbm [thread:$0]  %s322, 128, %s319, %s307
        $region36: #{tpu_custom_call.1} parent=31 // pred_fallthru
          _
      $region32: #{tpu_custom_call.1} parent=5 // pred_fallthru
        _
      %p325 = scmp.le.s32.totalorder 2, %s12
      // Predicated region
      $region37: #{tpu_custom_call.1} parent=5 // pred_check
        %p326 = pneg %p325
      $region38: #{tpu_custom_call.1} parent=5 // pred_check_branch
        %328 = sbr.rel (%p326) target = $region40
      $region39: #{tpu_custom_call.1} parent=5 // pred_region
        %s329 = ssub.s32 %s12, 2
        // Predicated region
        $region41: #{tpu_custom_call.1} parent=39 // pred_check
          %p330 = pneg %p123
        $region42: #{tpu_custom_call.1} parent=39 // pred_check_branch
          %332 = sbr.rel (%p330) target = $region44
        $region43: #{tpu_custom_call.1} parent=39 // pred_region
          %s333 = sand.u32 %s108, 1
          %s334 = scalar_lea.sflag [#allocation3], %s333
          %s335 = sand.u32 %s108, 1
          %s336 = smul.addr %s335, 8
          %s337 = scalar_lea.vmem [#allocation2], %s336
          %338 = dma.done %s334, 128
        $region44: #{tpu_custom_call.1} parent=39 // pred_fallthru
          _
      $region40: #{tpu_custom_call.1} parent=5 // pred_fallthru
        _
    $region6: #{tpu_custom_call.1} parent=1 // loop_footer
      %s16 = sadd.s32 1, %s12
    $region7: #{tpu_custom_call.1} parent=1 // loop_footer_branch
      %11 = sbr.rel target = $region3
    $region8: #{tpu_custom_call.1} parent=1 // loop_exit
      _
    %339 = vsyncpa [#allocation3], 1
    %s340 = scalar_lea.sflag [#allocation3], 1
    %341 = vsyncpa %s340, 1

</llo_original>
